<compile_context>
chip_gen: v7x
topology: tpu7x:2x2x1
jax: 0.10.0
libtpu: 0.0.40
codegen_flags: <defaults>
</compile_context>

<pallas_src>
import jax
import jax.numpy as jnp
from jax import lax
from jax.experimental import pallas as pl
from jax.experimental.pallas import tpu as pltpu


# -----------------------------------------------------------------------------
# Fused-MLP kernel: runs both networks (feature-concatenated) entirely in VMEM
# -----------------------------------------------------------------------------
def make_fused_mlp_kernel(layer_widths, out_dim, eps=1e-5):
    """Kernel refs: x, W_0..W_{L-1} (fused hidden weights), W_final, vec, out.

    `vec` packs [gamma_0, beta_0, gamma_1, beta_1, ..., final_bias] as rows of
    a single (2*L + 1, max_width) f32 array (zero-padded on the lane axis).
    """
    num_hidden = len(layer_widths)

    def kernel(*refs):
        x_ref = refs[0]
        w_refs = refs[1:1 + num_hidden]
        wf_ref = refs[1 + num_hidden]
        vec_ref = refs[2 + num_hidden]
        out_ref = refs[3 + num_hidden]

        h = x_ref[...].astype(jnp.float32)
        for l, w_l in enumerate(layer_widths):
            # Linear (pre-BN bias dropped: exactly cancelled by mean subtraction)
            y = jnp.dot(h, w_refs[l][...], preferred_element_type=jnp.float32)
            # BatchNorm1d, training mode: batch mean, biased batch variance
            mean = jnp.mean(y, axis=0, keepdims=True)
            d = y - mean
            var = jnp.mean(d * d, axis=0, keepdims=True)
            gamma = vec_ref[2 * l:2 * l + 1, :][:, :w_l]
            beta = vec_ref[2 * l + 1:2 * l + 2, :][:, :w_l]
            scale = gamma * lax.rsqrt(var + eps)
            y = d * scale + beta
            # Swish
            h = y * jax.nn.sigmoid(y)

        bias_row = vec_ref[2 * num_hidden:2 * num_hidden + 1, :]
        bf = bias_row[:, :out_dim]
        out_ref[...] = jnp.dot(h, wf_ref[...],
                               preferred_element_type=jnp.float32) + bf

    return kernel


# -----------------------------------------------------------------------------
# Parameter construction (deterministic, mimics nn.Linear / nn.BatchNorm1d init)
# -----------------------------------------------------------------------------
def init_linear(key, fan_in, fan_out):
    k1, k2 = jax.random.split(key)
    bound = 1.0 / float(fan_in) ** 0.5
    w = jax.random.uniform(k1, (fan_in, fan_out), jnp.float32, -bound, bound)
    b = jax.random.uniform(k2, (1, fan_out), jnp.float32, -bound, bound)
    return w, b


def init_nn_params(key, layers):
    """layers = [d0, d1, ..., dk]; hidden layers are layers[1:-1]."""
    hidden_params = []
    keys = jax.random.split(key, len(layers) - 1)
    for i, (din, dout) in enumerate(zip(layers[:-2], layers[1:-1])):
        w, b = init_linear(keys[i], din, dout)
        gamma = jnp.ones((1, dout), jnp.float32)   # BatchNorm1d weight
        beta = jnp.zeros((1, dout), jnp.float32)   # BatchNorm1d bias
        hidden_params.append((w, b, gamma, beta))
    final_w, final_b = init_linear(keys[-1], layers[-2], layers[-1])
    return hidden_params, final_w, final_b


# -----------------------------------------------------------------------------
# Fuse dynamics + reward parameters into one block-diagonal network
# -----------------------------------------------------------------------------
def _blockdiag(a, b):
    za = jnp.zeros((a.shape[0], b.shape[1]), a.dtype)
    zb = jnp.zeros((b.shape[0], a.shape[1]), b.dtype)
    return jnp.concatenate(
        [jnp.concatenate([a, za], axis=1),
         jnp.concatenate([zb, b], axis=1)], axis=0)


def fuse_environment_model(dyn_params, rew_params):
    dyn_hidden, dyn_wf, dyn_bf = dyn_params
    rew_hidden, rew_wf, rew_bf = rew_params
    assert len(dyn_hidden) == len(rew_hidden)
    num_hidden = len(dyn_hidden)

    fused_ws, widths, gb_rows = [], [], []
    for l in range(num_hidden):
        dw, _db, dg, dbt = dyn_hidden[l]   # pre-BN biases dropped (exact no-op)
        rw, _rb, rg, rbt = rew_hidden[l]
        w = jnp.concatenate([dw, rw], axis=1) if l == 0 else _blockdiag(dw, rw)
        fused_ws.append(w)
        widths.append(w.shape[1])
        gb_rows.append(jnp.concatenate([dg, rg], axis=1))    # fused gamma
        gb_rows.append(jnp.concatenate([dbt, rbt], axis=1))  # fused beta

    wf = _blockdiag(dyn_wf, rew_wf)                    # (2*h, state_dim + 1)
    bf = jnp.concatenate([dyn_bf, rew_bf], axis=1)     # (1,   state_dim + 1)
    out_dim = wf.shape[1]
    max_w = max(widths + [out_dim])

    def pad(row):
        return jnp.pad(row, ((0, 0), (0, max_w - row.shape[1])))

    vec = jnp.concatenate([pad(r) for r in gb_rows] + [pad(bf)], axis=0)

    return {"ws": fused_ws, "wf": wf, "vec": vec,
            "widths": tuple(widths), "out_dim": out_dim,
            "dyn_out_dim": dyn_wf.shape[1]}


# -----------------------------------------------------------------------------
# EnvironmentModelSeparateReward forward (single pallas_call)
# -----------------------------------------------------------------------------
def environment_model_forward(x, fused, catreward=True):
    x = jnp.squeeze(x)   # matches torch.squeeze(x) in the original module
    batch = x.shape[0]
    kernel = make_fused_mlp_kernel(fused["widths"], fused["out_dim"])
    inputs = [x] + list(fused["ws"]) + [fused["wf"], fused["vec"]]
    out = pl.pallas_call(
        kernel,
        out_shape=jax.ShapeDtypeStruct((batch, fused["out_dim"]), jnp.float32),
        in_specs=[pl.BlockSpec(memory_space=pltpu.MemorySpace.VMEM)] * len(inputs),
        out_specs=pl.BlockSpec(memory_space=pltpu.MemorySpace.VMEM),
    )(*inputs)
    if catreward:
        return out
    d = fused["dyn_out_dim"]
    return out[:, :d], out[:, d:]


# -----------------------------------------------------------------------------
# Pure-JAX reference (original, UNfused math WITH pre-BN biases)
# -----------------------------------------------------------------------------
def mlp_forward_ref(x, hidden_params, final_w, final_b, eps=1e-5):
    h = x.astype(jnp.float32)
    for (w, b, gamma, beta) in hidden_params:
        y = h @ w + b
        mean = jnp.mean(y, axis=0, keepdims=True)
        var = jnp.mean((y - mean) ** 2, axis=0, keepdims=True)
        y = (y - mean) / jnp.sqrt(var + eps) * gamma + beta
        h = y * jax.nn.sigmoid(y)
    return h @ final_w + final_b


def environment_model_ref(x, dyn_params, rew_params):
    x = jnp.squeeze(x)
    d = mlp_forward_ref(x, *dyn_params)
    r = mlp_forward_ref(x, *rew_params)
    return jnp.concatenate((d, r), axis=-1)


# -----------------------------------------------------------------------------
if __name__ == "__main__":
    # Small shapes: state_dim=12, action_dim=4, hidden=[32, 32], batch=8
    state_dim, action_dim = 12, 4
    hidden_layers = [32, 32]
    batch = 8

    layers_dynamics = [state_dim + action_dim] + hidden_layers + [state_dim]
    layers_reward = [state_dim + action_dim] + hidden_layers + [1]

    root = jax.random.PRNGKey(0)
    k_dyn, k_rew, k_x = jax.random.split(root, 3)

    dyn_params = init_nn_params(k_dyn, layers_dynamics)
    rew_params = init_nn_params(k_rew, layers_reward)
    fused = fuse_environment_model(dyn_params, rew_params)

    x = jax.random.normal(k_x, (batch, state_dim + action_dim), jnp.float32)

    out = environment_model_forward(x, fused, catreward=True)
    out = jax.block_until_ready(out)

    ref = environment_model_ref(x, dyn_params, rew_params)
    assert out.shape == (batch, state_dim + 1), out.shape
    assert jnp.allclose(out, ref, atol=1e-4, rtol=1e-4), "mismatch vs reference"

    print("KERNEL_OK")
</pallas_src>

<mosaic_0001>
module attributes {stable_mosaic.version = 11 : i64} {
  func.func @kernel(%arg0: memref<8x16xf32, #tpu.memory_space<vmem>>, %arg1: memref<16x64xf32, #tpu.memory_space<vmem>>, %arg2: memref<64x64xf32, #tpu.memory_space<vmem>>, %arg3: memref<64x13xf32, #tpu.memory_space<vmem>>, %arg4: memref<5x64xf32, #tpu.memory_space<vmem>>, %arg5: memref<8x13xf32, #tpu.memory_space<vmem>>) attributes {dimension_semantics = [], scalar_prefetch = 0 : i64, scratch_operands = 0 : i64, tpu.core_type = #tpu.core_type<tc>} {
    %c0 = arith.constant 0 : index
    %c0_0 = arith.constant 0 : index
    %0 = vector.load %arg0[%c0, %c0_0] : memref<8x16xf32, #tpu.memory_space<vmem>>, vector<8x16xf32>
    %c0_1 = arith.constant 0 : index
    %c0_2 = arith.constant 0 : index
    %1 = vector.load %arg1[%c0_1, %c0_2] : memref<16x64xf32, #tpu.memory_space<vmem>>, vector<16x64xf32>
    %cst = arith.constant dense<0.000000e+00> : vector<8x64xf32>
    %2 = tpu.matmul %0, %1, %cst {dimension_numbers = #tpu.dot_dimension_numbers<[1], [0], [0], [1], [0, 0, 1, 1], [], []>} : vector<8x16xf32>, vector<16x64xf32>, vector<8x64xf32> -> vector<8x64xf32>
    %cst_3 = arith.constant dense<0.000000e+00> : vector<64xf32>
    %3 = vector.multi_reduction <add>, %2, %cst_3 [0] : vector<8x64xf32> to vector<64xf32>
    %4 = vector.shape_cast %3 : vector<64xf32> to vector<1x64xf32>
    %cst_4 = arith.constant 8.000000e+00 : f32
    %5 = vector.broadcast %cst_4 : f32 to vector<1x64xf32>
    %6 = arith.divf %4, %5 : vector<1x64xf32>
    %7 = vector.broadcast %6 : vector<1x64xf32> to vector<8x64xf32>
    %8 = arith.subf %2, %7 : vector<8x64xf32>
    %9 = arith.mulf %8, %8 : vector<8x64xf32>
    %cst_5 = arith.constant dense<0.000000e+00> : vector<64xf32>
    %10 = vector.multi_reduction <add>, %9, %cst_5 [0] : vector<8x64xf32> to vector<64xf32>
    %11 = vector.shape_cast %10 : vector<64xf32> to vector<1x64xf32>
    %cst_6 = arith.constant 8.000000e+00 : f32
    %12 = vector.broadcast %cst_6 : f32 to vector<1x64xf32>
    %13 = arith.divf %11, %12 : vector<1x64xf32>
    %c0_7 = arith.constant 0 : index
    %c0_8 = arith.constant 0 : index
    %14 = vector.load %arg4[%c0_7, %c0_8] : memref<5x64xf32, #tpu.memory_space<vmem>>, vector<1x64xf32>
    %c1 = arith.constant 1 : index
    %c0_9 = arith.constant 0 : index
    %15 = vector.load %arg4[%c1, %c0_9] : memref<5x64xf32, #tpu.memory_space<vmem>>, vector<1x64xf32>
    %cst_10 = arith.constant 9.99999974E-6 : f32
    %16 = vector.broadcast %cst_10 : f32 to vector<1x64xf32>
    %17 = arith.addf %13, %16 : vector<1x64xf32>
    %18 = math.rsqrt %17 : vector<1x64xf32>
    %19 = arith.mulf %14, %18 : vector<1x64xf32>
    %20 = vector.broadcast %19 : vector<1x64xf32> to vector<8x64xf32>
    %21 = arith.mulf %8, %20 : vector<8x64xf32>
    %22 = vector.broadcast %15 : vector<1x64xf32> to vector<8x64xf32>
    %23 = arith.addf %21, %22 : vector<8x64xf32>
    %24 = arith.negf %23 : vector<8x64xf32>
    %25 = math.exp %24 : vector<8x64xf32>
    %cst_11 = arith.constant 1.000000e+00 : f32
    %26 = vector.broadcast %cst_11 : f32 to vector<8x64xf32>
    %27 = arith.addf %26, %25 : vector<8x64xf32>
    %28 = arith.divf %26, %27 : vector<8x64xf32>
    %29 = arith.mulf %23, %28 : vector<8x64xf32>
    %c0_12 = arith.constant 0 : index
    %c0_13 = arith.constant 0 : index
    %30 = vector.load %arg2[%c0_12, %c0_13] : memref<64x64xf32, #tpu.memory_space<vmem>>, vector<64x64xf32>
    %cst_14 = arith.constant dense<0.000000e+00> : vector<8x64xf32>
    %31 = tpu.matmul %29, %30, %cst_14 {dimension_numbers = #tpu.dot_dimension_numbers<[1], [0], [0], [1], [0, 0, 1, 1], [], []>} : vector<8x64xf32>, vector<64x64xf32>, vector<8x64xf32> -> vector<8x64xf32>
    %cst_15 = arith.constant dense<0.000000e+00> : vector<64xf32>
    %32 = vector.multi_reduction <add>, %31, %cst_15 [0] : vector<8x64xf32> to vector<64xf32>
    %33 = vector.shape_cast %32 : vector<64xf32> to vector<1x64xf32>
    %cst_16 = arith.constant 8.000000e+00 : f32
    %34 = vector.broadcast %cst_16 : f32 to vector<1x64xf32>
    %35 = arith.divf %33, %34 : vector<1x64xf32>
    %36 = vector.broadcast %35 : vector<1x64xf32> to vector<8x64xf32>
    %37 = arith.subf %31, %36 : vector<8x64xf32>
    %38 = arith.mulf %37, %37 : vector<8x64xf32>
    %cst_17 = arith.constant dense<0.000000e+00> : vector<64xf32>
    %39 = vector.multi_reduction <add>, %38, %cst_17 [0] : vector<8x64xf32> to vector<64xf32>
    %40 = vector.shape_cast %39 : vector<64xf32> to vector<1x64xf32>
    %cst_18 = arith.constant 8.000000e+00 : f32
    %41 = vector.broadcast %cst_18 : f32 to vector<1x64xf32>
    %42 = arith.divf %40, %41 : vector<1x64xf32>
    %c2 = arith.constant 2 : index
    %c0_19 = arith.constant 0 : index
    %43 = vector.load %arg4[%c2, %c0_19] : memref<5x64xf32, #tpu.memory_space<vmem>>, vector<1x64xf32>
    %c3 = arith.constant 3 : index
    %c0_20 = arith.constant 0 : index
    %44 = vector.load %arg4[%c3, %c0_20] : memref<5x64xf32, #tpu.memory_space<vmem>>, vector<1x64xf32>
    %cst_21 = arith.constant 9.99999974E-6 : f32
    %45 = vector.broadcast %cst_21 : f32 to vector<1x64xf32>
    %46 = arith.addf %42, %45 : vector<1x64xf32>
    %47 = math.rsqrt %46 : vector<1x64xf32>
    %48 = arith.mulf %43, %47 : vector<1x64xf32>
    %49 = vector.broadcast %48 : vector<1x64xf32> to vector<8x64xf32>
    %50 = arith.mulf %37, %49 : vector<8x64xf32>
    %51 = vector.broadcast %44 : vector<1x64xf32> to vector<8x64xf32>
    %52 = arith.addf %50, %51 : vector<8x64xf32>
    %53 = arith.negf %52 : vector<8x64xf32>
    %54 = math.exp %53 : vector<8x64xf32>
    %cst_22 = arith.constant 1.000000e+00 : f32
    %55 = vector.broadcast %cst_22 : f32 to vector<8x64xf32>
    %56 = arith.addf %55, %54 : vector<8x64xf32>
    %57 = arith.divf %55, %56 : vector<8x64xf32>
    %58 = arith.mulf %52, %57 : vector<8x64xf32>
    %c4 = arith.constant 4 : index
    %c0_23 = arith.constant 0 : index
    %59 = vector.load %arg4[%c4, %c0_23] : memref<5x64xf32, #tpu.memory_space<vmem>>, vector<1x64xf32>
    %60 = vector.extract_strided_slice %59 {offsets = [0, 0], sizes = [1, 13], strides = [1, 1]} : vector<1x64xf32> to vector<1x13xf32>
    %c0_24 = arith.constant 0 : index
    %c0_25 = arith.constant 0 : index
    %61 = vector.load %arg3[%c0_24, %c0_25] : memref<64x13xf32, #tpu.memory_space<vmem>>, vector<64x13xf32>
    %cst_26 = arith.constant dense<0.000000e+00> : vector<8x13xf32>
    %62 = tpu.matmul %58, %61, %cst_26 {dimension_numbers = #tpu.dot_dimension_numbers<[1], [0], [0], [1], [0, 0, 1, 1], [], []>} : vector<8x64xf32>, vector<64x13xf32>, vector<8x13xf32> -> vector<8x13xf32>
    %63 = vector.broadcast %60 : vector<1x13xf32> to vector<8x13xf32>
    %64 = arith.addf %62, %63 : vector<8x13xf32>
    %c0_27 = arith.constant 0 : index
    %c0_28 = arith.constant 0 : index
    %65 = vector.load %arg5[%c0_27, %c0_28] : memref<8x13xf32, #tpu.memory_space<vmem>>, vector<8x13xf32>
    tpu.vector_store %arg5[%c0_27, %c0_28], %64 {strides = array<i32>} : memref<8x13xf32, #tpu.memory_space<vmem>>, vector<8x13xf32>,
    return
  }
}

</mosaic_0001>

<llo_original>
// kernel: tpu_custom_call.1
$region0: #{tpu_custom_call.1}
  #allocation0 [shape = 'u32[]', space=smem, size = 0x4, offset = 0x4, fixed_abs, tag = 'smem constant byte address 0x4 - core index']
  #allocation1 [shape = 'u32[144,128]{1,0:T(1,128)}', space=vmem, size = 0x12000, scoped, tag = 'internal scratch']
  %s0 = inlined_call_operand.hbm [shape: f32[8,16], index: 0, kind: input, shape index: {}]
  %s1 = inlined_call_operand.vmem [shape: f32[16,64], index: 1, kind: input, shape index: {}]
  %s2 = inlined_call_operand.vmem [shape: f32[64,64], index: 2, kind: input, shape index: {}]
  %s3 = inlined_call_operand.vmem [shape: f32[64,13], index: 3, kind: input, shape index: {}]
  %s4 = inlined_call_operand.vmem [shape: f32[5,64], index: 4, kind: input, shape index: {}]
  %s5 = inlined_call_operand.hbm [shape: f32[8,13], index: 5, kind: output, shape index: {}]
  %s6 = sld [smem:[#allocation0]]
  $region34: #{tpu_custom_call.1} parent=0
    _
  %s8 = ssub.s32 1, %s6
  %s9 = scalar_select 0, %s8, %s6
  $region1: #{tpu_custom_call.1} parent=0
    #allocation2 [shape = 'u8[4096]{0}', space=vmem, size = 0x1000, scoped, tag = 'input window, operand 0, single buffered']
    #allocation3 [shape = 's32[1]{0}', space=sflag, size = 0x4, scoped, tag = 'scoped memory for tpu_custom_call.1']
    #allocation4 [shape = 's32[1]{0}', space=sflag, size = 0x4, scoped, tag = 'scoped memory for tpu_custom_call.1']
    #allocation5 [shape = 'u8[4096]{0}', space=vmem, size = 0x1000, scoped, tag = 'output window, operand 0, single buffered']
    %10 = vsyncpa [#allocation3], 0
    %11 = vsyncpa [#allocation4], 0
    // Predicated region
    $region2: #{tpu_custom_call.1} parent=1 // pred_check
      _
    $region3: #{tpu_custom_call.1} parent=1 // pred_check_branch
      %13 = sbr.rel (0) target = $region5
    $region4: #{tpu_custom_call.1} parent=1 // pred_region
      %s15 = ssub.s32 128, 128
      %16 = vsyncadd [#allocation3], %s15
      %s18 = sshll.u32 [#allocation2], 4
      %s19 = int_to_ptr.vmem [resolvable:$true] %s18
      %21 = dma.hbm_to_vmem [thread:$0]  %s0, 128, %s19, [#allocation3]
    $region5: #{tpu_custom_call.1} parent=1 // pred_fallthru
      _
    // Predicated region
    $region6: #{tpu_custom_call.1} parent=1 // pred_check
      _
    $region7: #{tpu_custom_call.1} parent=1 // pred_check_branch
      %23 = sbr.rel (0) target = $region9
    $region8: #{tpu_custom_call.1} parent=1 // pred_region
      _
    $region9: #{tpu_custom_call.1} parent=1 // pred_fallthru
      _
    // Predicated region
    $region10: #{tpu_custom_call.1} parent=1 // pred_check
      _
    $region11: #{tpu_custom_call.1} parent=1 // pred_check_branch
      %25 = sbr.rel (0) target = $region13
    $region12: #{tpu_custom_call.1} parent=1 // pred_region
      _
    $region13: #{tpu_custom_call.1} parent=1 // pred_fallthru
      _
    // Predicated region
    $region14: #{tpu_custom_call.1} parent=1 // pred_check
      _
    $region15: #{tpu_custom_call.1} parent=1 // pred_check_branch
      %27 = sbr.rel (0) target = $region17
    $region16: #{tpu_custom_call.1} parent=1 // pred_region
      _
    $region17: #{tpu_custom_call.1} parent=1 // pred_fallthru
      _
    // Predicated region
    $region18: #{tpu_custom_call.1} parent=1 // pred_check
      _
    $region19: #{tpu_custom_call.1} parent=1 // pred_check_branch
      %29 = sbr.rel (0) target = $region21
    $region20: #{tpu_custom_call.1} parent=1 // pred_region
      _
    $region21: #{tpu_custom_call.1} parent=1 // pred_fallthru
      _
    // Predicated region
    $region22: #{tpu_custom_call.1} parent=1 // pred_check
      _
    $region23: #{tpu_custom_call.1} parent=1 // pred_check_branch
      %31 = sbr.rel (0) target = $region25
    $region24: #{tpu_custom_call.1} parent=1 // pred_region
      %32 = dma.done [#allocation3], 128
    $region25: #{tpu_custom_call.1} parent=1 // pred_fallthru
      _
    %v33 = vld [vmem:[#allocation2] sm:$0xff]
    %v34 = vld [vmem:[%s1] sm:$0xff]
    %v35 = vld [vmem:[%s1 + $0x8] sm:$0xff]
    %vm36 = vcmask 130048
    %v38 = vsel %vm36, %v33, 0
    %40 = vmatprep.subr.mxu0 0.0
    %41 = vmatpush1.msra.mxu0 %v34
    %42 = vmatprep.subr.mxu0 0.0
    %43 = vmatpush1.msra.mxu0 %v35
    %44 = vmatprep.subr.mxu0 0.0
    %45 = vmatpush1.msra.mxu0 0.0
    %46 = vmatprep.subr.mxu0 0.0
    %47 = vmatpush1.msra.mxu0 0.0
    %48 = vmatprep.subr.mxu0 0.0
    %49 = vmatpush1.msra.mxu0 0.0
    %50 = vmatprep.subr.mxu0 0.0
    %51 = vmatpush1.msra.mxu0 0.0
    %52 = vmatprep.subr.mxu0 0.0
    %53 = vmatpush1.msra.mxu0 0.0
    %54 = vmatprep.subr.mxu0 0.0
    %55 = vmatpush1.msra.mxu0 0.0
    %56 = vmatprep.subr.mxu0 0.0
    %57 = vmatpush1.msra.mxu0 0.0
    %58 = vmatprep.subr.mxu0 0.0
    %59 = vmatpush1.msra.mxu0 0.0
    %60 = vmatprep.subr.mxu0 0.0
    %61 = vmatpush1.msra.mxu0 0.0
    %62 = vmatprep.subr.mxu0 0.0
    %63 = vmatpush1.msra.mxu0 0.0
    %64 = vmatprep.subr.mxu0 0.0
    %65 = vmatpush1.msra.mxu0 0.0
    %66 = vmatprep.subr.mxu0 0.0
    %67 = vmatpush1.msra.mxu0 0.0
    %68 = vmatprep.subr.mxu0 0.0
    %69 = vmatpush1.msra.mxu0 0.0
    %70 = vmatprep.subr.mxu0 0.0
    %71 = vmatpush1.msra.mxu0 0.0
    %72 = vmatprep.subr.mxu0 0.0
    %73 = vmatpush1.msra.mxu0 0.0
    %74 = vmatprep.subr.mxu0 0.0
    %75 = vmatpush1.msra.mxu0 0.0
    %76 = vmatprep.subr.mxu0 0.0
    %77 = vmatpush1.msra.mxu0 0.0
    %78 = vmatprep.subr.mxu0 0.0
    %79 = vmatpush1.msra.mxu0 0.0
    %80 = vmatprep.subr.mxu0 0.0
    %81 = vmatpush1.msra.mxu0 0.0
    %82 = vmatprep.subr.mxu0 0.0
    %83 = vmatpush1.msra.mxu0 0.0
    %84 = vmatprep.subr.mxu0 0.0
    %85 = vmatpush1.msra.mxu0 0.0
    %86 = vmatprep.subr.mxu0 0.0
    %87 = vmatpush1.msra.mxu0 0.0
    %88 = vmatprep.subr.mxu0 0.0
    %89 = vmatpush1.msra.mxu0 0.0
    %90 = vmatprep.subr.mxu0 0.0
    %91 = vmatpush1.msra.mxu0 0.0
    %92 = vmatprep.subr.mxu0 0.0
    %93 = vmatpush1.msra.mxu0 0.0
    %94 = vmatprep.subr.mxu0 0.0
    %95 = vmatpush1.msra.mxu0 0.0
    %96 = vmatprep.subr.mxu0 0.0
    %97 = vmatpush1.msra.mxu0 0.0
    %98 = vmatprep.subr.mxu0 0.0
    %99 = vmatpush1.msra.mxu0 0.0
    %100 = vmatprep.subr.mxu0 0.0
    %101 = vmatpush1.msra.mxu0 0.0
    %102 = vmatprep.subr.mxu0 0.0
    %103 = vmatpush1.msra.mxu0 0.0
    %104 = vmatprep.mubr.f32.mxu0 0.0
    %105 = vmatmul.mubr.f32.gmra.mrb[0].mxu0 %v38
    %v106 = vpop.f32.mrb[0].mxu0
    %v107 = vadd.f32 0.0, %v106
    %v108 = vpop.f32.mrb[0].mxu0
    %109 = vdwg.mxu0
    %vm110 = vcmask 523264
    %v111 = vsel %vm110, %v107, 0.0
    %v112 = vrot.slane %v111, 4
    %v113 = vadd.f32 %v111, %v112
    %v114 = vrot.slane %v113, 2
    %v115 = vadd.f32 %v113, %v114
    %v116 = vrot.slane %v115, 1
    %v117 = vadd.f32 %v115, %v116
    %v118 = vrcp.pop 8.0
    %v119 = vmul.f32 %v117, %v118
    %v120 = vsub.f32 %v107, %v119
    %v121 = vmul.f32 %v120, %v120
    %v122 = vsel %vm110, %v121, 0.0
    %v123 = vrot.slane %v122, 4
    %v124 = vadd.f32 %v122, %v123
    %v125 = vrot.slane %v124, 2
    %v126 = vadd.f32 %v124, %v125
    %v127 = vrot.slane %v126, 1
    %v128 = vadd.f32 %v126, %v127
    %v129 = vmul.f32 %v128, %v118
    %v130 = vld [vmem:[%s4] sm:$0x1]
    %v131 = vld [vmem:[%s4 + $0x1] sm:$0x1]
    %v132 = vadd.f32 %v129, 1e-05
    %v133 = vrsqrt.pop %v132
    %v134 = vmul.f32 %v130, %v133
    %v135 = vlaneseq
    %v136 = vshrl.u32 %v135, 7
    %v137 = vsub.s32 0, %v136
    %v138 = vrot.slane %v134, %v137
    %v139 = vmul.f32 %v120, %v138
    %v140 = vlaneseq
    %v141 = vshrl.u32 %v140, 7
    %v142 = vsub.s32 0, %v141
    %v143 = vrot.slane %v131, %v142
    %v144 = vadd.f32 %v139, %v143
    %v145 = vxor.u32 %v144, 2147483648
    %v146 = vmul.f32 %v145, 1.442695
    %v147 = vpow.pop %v146
    %v148 = vadd.f32 %v147, 1.0
    %v149 = vrcp.pop %v148
    %v150 = vmul.f32 1.0, %v149
    %v151 = vmul.f32 %v144, %v150
    %v152 = vld [vmem:[%s2] sm:$0xff]
    %v153 = vld [vmem:[%s2 + $0x8] sm:$0xff]
    %v154 = vld [vmem:[%s2 + $0x10] sm:$0xff]
    %v155 = vld [vmem:[%s2 + $0x18] sm:$0xff]
    %v156 = vld [vmem:[%s2 + $0x20] sm:$0xff]
    %v157 = vld [vmem:[%s2 + $0x28] sm:$0xff]
    %v158 = vld [vmem:[%s2 + $0x30] sm:$0xff]
    %v159 = vld [vmem:[%s2 + $0x38] sm:$0xff]
    %v161 = vsel %vm110, %v151, 0
    %163 = vmatprep.subr.mxu0 0.0
    %164 = vmatpush1.msra.mxu0 %v152
    %165 = vmatprep.subr.mxu0 0.0
    %166 = vmatpush1.msra.mxu0 %v153
    %167 = vmatprep.subr.mxu0 0.0
    %168 = vmatpush1.msra.mxu0 %v154
    %169 = vmatprep.subr.mxu0 0.0
    %170 = vmatpush1.msra.mxu0 %v155
    %171 = vmatprep.subr.mxu0 0.0
    %172 = vmatpush1.msra.mxu0 %v156
    %173 = vmatprep.subr.mxu0 0.0
    %174 = vmatpush1.msra.mxu0 %v157
    %175 = vmatprep.subr.mxu0 0.0
    %176 = vmatpush1.msra.mxu0 %v158
    %177 = vmatprep.subr.mxu0 0.0
    %178 = vmatpush1.msra.mxu0 %v159
    %179 = vmatprep.subr.mxu0 0.0
    %180 = vmatpush1.msra.mxu0 0.0
    %181 = vmatprep.subr.mxu0 0.0
    %182 = vmatpush1.msra.mxu0 0.0
    %183 = vmatprep.subr.mxu0 0.0
    %184 = vmatpush1.msra.mxu0 0.0
    %185 = vmatprep.subr.mxu0 0.0
    %186 = vmatpush1.msra.mxu0 0.0
    %187 = vmatprep.subr.mxu0 0.0
    %188 = vmatpush1.msra.mxu0 0.0
    %189 = vmatprep.subr.mxu0 0.0
    %190 = vmatpush1.msra.mxu0 0.0
    %191 = vmatprep.subr.mxu0 0.0
    %192 = vmatpush1.msra.mxu0 0.0
    %193 = vmatprep.subr.mxu0 0.0
    %194 = vmatpush1.msra.mxu0 0.0
    %195 = vmatprep.subr.mxu0 0.0
    %196 = vmatpush1.msra.mxu0 0.0
    %197 = vmatprep.subr.mxu0 0.0
    %198 = vmatpush1.msra.mxu0 0.0
    %199 = vmatprep.subr.mxu0 0.0
    %200 = vmatpush1.msra.mxu0 0.0
    %201 = vmatprep.subr.mxu0 0.0
    %202 = vmatpush1.msra.mxu0 0.0
    %203 = vmatprep.subr.mxu0 0.0
    %204 = vmatpush1.msra.mxu0 0.0
    %205 = vmatprep.subr.mxu0 0.0
    %206 = vmatpush1.msra.mxu0 0.0
    %207 = vmatprep.subr.mxu0 0.0
    %208 = vmatpush1.msra.mxu0 0.0
    %209 = vmatprep.subr.mxu0 0.0
    %210 = vmatpush1.msra.mxu0 0.0
    %211 = vmatprep.subr.mxu0 0.0
    %212 = vmatpush1.msra.mxu0 0.0
    %213 = vmatprep.subr.mxu0 0.0
    %214 = vmatpush1.msra.mxu0 0.0
    %215 = vmatprep.subr.mxu0 0.0
    %216 = vmatpush1.msra.mxu0 0.0
    %217 = vmatprep.subr.mxu0 0.0
    %218 = vmatpush1.msra.mxu0 0.0
    %219 = vmatprep.subr.mxu0 0.0
    %220 = vmatpush1.msra.mxu0 0.0
    %221 = vmatprep.subr.mxu0 0.0
    %222 = vmatpush1.msra.mxu0 0.0
    %223 = vmatprep.subr.mxu0 0.0
    %224 = vmatpush1.msra.mxu0 0.0
    %225 = vmatprep.subr.mxu0 0.0
    %226 = vmatpush1.msra.mxu0 0.0
    %227 = vmatprep.mubr.f32.mxu0 0.0
    %228 = vmatmul.mubr.f32.gmra.mrb[0].mxu0 %v161
    %v229 = vpop.f32.mrb[0].mxu0
    %v230 = vadd.f32 0.0, %v229
    %v231 = vpop.f32.mrb[0].mxu0
    %232 = vdwg.mxu0
    %v233 = vsel %vm110, %v230, 0.0
    %v234 = vrot.slane %v233, 4
    %v235 = vadd.f32 %v233, %v234
    %v236 = vrot.slane %v235, 2
    %v237 = vadd.f32 %v235, %v236
    %v238 = vrot.slane %v237, 1
    %v239 = vadd.f32 %v237, %v238
    %v240 = vmul.f32 %v239, %v118
    %v241 = vsub.f32 %v230, %v240
    %v242 = vmul.f32 %v241, %v241
    %v243 = vsel %vm110, %v242, 0.0
    %v244 = vrot.slane %v243, 4
    %v245 = vadd.f32 %v243, %v244
    %v246 = vrot.slane %v245, 2
    %v247 = vadd.f32 %v245, %v246
    %v248 = vrot.slane %v247, 1
    %v249 = vadd.f32 %v247, %v248
    %v250 = vmul.f32 %v249, %v118
    %v251 = vld [vmem:[%s4 + $0x2] sm:$0x1]
    %v252 = vld [vmem:[%s4 + $0x3] sm:$0x1]
    %v253 = vadd.f32 %v250, 1e-05
    %v254 = vrsqrt.pop %v253
    %v255 = vmul.f32 %v251, %v254
    %v256 = vlaneseq
    %v257 = vshrl.u32 %v256, 7
    %v258 = vsub.s32 0, %v257
    %v259 = vrot.slane %v255, %v258
    %v260 = vmul.f32 %v241, %v259
    %v261 = vlaneseq
    %v262 = vshrl.u32 %v261, 7
    %v263 = vsub.s32 0, %v262
    %v264 = vrot.slane %v252, %v263
    %v265 = vadd.f32 %v260, %v264
    %v266 = vxor.u32 %v265, 2147483648
    %v267 = vmul.f32 %v266, 1.442695
    %v268 = vpow.pop %v267
    %v269 = vadd.f32 %v268, 1.0
    %v270 = vrcp.pop %v269
    %v271 = vmul.f32 1.0, %v270
    %v272 = vmul.f32 %v265, %v271
    %v273 = vld [vmem:[%s4 + $0x4] sm:$0x1]
    %v274 = vld [vmem:[%s3] sm:$0xff]
    %v275 = vld [vmem:[%s3 + $0x8] sm:$0xff]
    %v276 = vld [vmem:[%s3 + $0x10] sm:$0xff]
    %v277 = vld [vmem:[%s3 + $0x18] sm:$0xff]
    %v278 = vld [vmem:[%s3 + $0x20] sm:$0xff]
    %v279 = vld [vmem:[%s3 + $0x28] sm:$0xff]
    %v280 = vld [vmem:[%s3 + $0x30] sm:$0xff]
    %v281 = vld [vmem:[%s3 + $0x38] sm:$0xff]
    %v282 = vlaneseq
    %v283 = vshrl.u32 %v282, 7
    %v284 = vsub.s32 0, %v283
    %v285 = vrot.slane %v273, %v284
    %v287 = vsel %vm110, %v272, 0
    %289 = vmatprep.subr.mxu0 0.0
    %290 = vmatpush1.msra.mxu0 %v274
    %291 = vmatprep.subr.mxu0 0.0
    %292 = vmatpush1.msra.mxu0 %v275
    %293 = vmatprep.subr.mxu0 0.0
    %294 = vmatpush1.msra.mxu0 %v276
    %295 = vmatprep.subr.mxu0 0.0
    %296 = vmatpush1.msra.mxu0 %v277
    %297 = vmatprep.subr.mxu0 0.0
    %298 = vmatpush1.msra.mxu0 %v278
    %299 = vmatprep.subr.mxu0 0.0
    %300 = vmatpush1.msra.mxu0 %v279
    %301 = vmatprep.subr.mxu0 0.0
    %302 = vmatpush1.msra.mxu0 %v280
    %303 = vmatprep.subr.mxu0 0.0
    %304 = vmatpush1.msra.mxu0 %v281
    %305 = vmatprep.subr.mxu0 0.0
    %306 = vmatpush1.msra.mxu0 0.0
    %307 = vmatprep.subr.mxu0 0.0
    %308 = vmatpush1.msra.mxu0 0.0
    %309 = vmatprep.subr.mxu0 0.0
    %310 = vmatpush1.msra.mxu0 0.0
    %311 = vmatprep.subr.mxu0 0.0
    %312 = vmatpush1.msra.mxu0 0.0
    %313 = vmatprep.subr.mxu0 0.0
    %314 = vmatpush1.msra.mxu0 0.0
    %315 = vmatprep.subr.mxu0 0.0
    %316 = vmatpush1.msra.mxu0 0.0
    %317 = vmatprep.subr.mxu0 0.0
    %318 = vmatpush1.msra.mxu0 0.0
    %319 = vmatprep.subr.mxu0 0.0
    %320 = vmatpush1.msra.mxu0 0.0
    %321 = vmatprep.subr.mxu0 0.0
    %322 = vmatpush1.msra.mxu0 0.0
    %323 = vmatprep.subr.mxu0 0.0
    %324 = vmatpush1.msra.mxu0 0.0
    %325 = vmatprep.subr.mxu0 0.0
    %326 = vmatpush1.msra.mxu0 0.0
    %327 = vmatprep.subr.mxu0 0.0
    %328 = vmatpush1.msra.mxu0 0.0
    %329 = vmatprep.subr.mxu0 0.0
    %330 = vmatpush1.msra.mxu0 0.0
    %331 = vmatprep.subr.mxu0 0.0
    %332 = vmatpush1.msra.mxu0 0.0
    %333 = vmatprep.subr.mxu0 0.0
    %334 = vmatpush1.msra.mxu0 0.0
    %335 = vmatprep.subr.mxu0 0.0
    %336 = vmatpush1.msra.mxu0 0.0
    %337 = vmatprep.subr.mxu0 0.0
    %338 = vmatpush1.msra.mxu0 0.0
    %339 = vmatprep.subr.mxu0 0.0
    %340 = vmatpush1.msra.mxu0 0.0
    %341 = vmatprep.subr.mxu0 0.0
    %342 = vmatpush1.msra.mxu0 0.0
    %343 = vmatprep.subr.mxu0 0.0
    %344 = vmatpush1.msra.mxu0 0.0
    %345 = vmatprep.subr.mxu0 0.0
    %346 = vmatpush1.msra.mxu0 0.0
    %347 = vmatprep.subr.mxu0 0.0
    %348 = vmatpush1.msra.mxu0 0.0
    %349 = vmatprep.subr.mxu0 0.0
    %350 = vmatpush1.msra.mxu0 0.0
    %351 = vmatprep.subr.mxu0 0.0
    %352 = vmatpush1.msra.mxu0 0.0
    %353 = vmatprep.mubr.f32.mxu0 0.0
    %354 = vmatmul.mubr.f32.gmra.mrb[0].mxu0 %v287
    %v355 = vpop.f32.mrb[0].mxu0
    %v356 = vadd.f32 %v285, %v355
    %v357 = vpop.f32.mrb[0].mxu0
    %358 = vdwg.mxu0
    %vm359 = vcmask 105472
    %360 = vst.msk [vmem:[#allocation5] sm:$0xff] %vm359, %v356
    // Predicated region
    $region26: #{tpu_custom_call.1} parent=1 // pred_check
      _
    $region27: #{tpu_custom_call.1} parent=1 // pred_check_branch
      %362 = sbr.rel (0) target = $region29
    $region28: #{tpu_custom_call.1} parent=1 // pred_region
      %s364 = ssub.s32 128, 128
      %365 = vsyncadd [#allocation4], %s364
      %s367 = sshll.u32 [#allocation5], 4
      %s368 = int_to_ptr.vmem [resolvable:$true] %s367
      %370 = dma.vmem_to_hbm [thread:$0]  %s368, 128, %s5, [#allocation4]
    $region29: #{tpu_custom_call.1} parent=1 // pred_fallthru
      _
    // Predicated region
    $region30: #{tpu_custom_call.1} parent=1 // pred_check
      _
    $region31: #{tpu_custom_call.1} parent=1 // pred_check_branch
      %372 = sbr.rel (0) target = $region33
    $region32: #{tpu_custom_call.1} parent=1 // pred_region
      %373 = dma.done [#allocation4], 128
    $region33: #{tpu_custom_call.1} parent=1 // pred_fallthru
      _
    %374 = vsyncpa [#allocation3], 1
    %375 = vsyncpa [#allocation4], 1

</llo_original>
